<compile_context>
chip_gen: v7x
topology: tpu7x:2x2x1
jax: 0.10.0
libtpu: 0.0.40
codegen_flags: <defaults>
</compile_context>

<pallas_src>
import functools

import jax
import jax.numpy as jnp
from jax.experimental import pallas as pl
from jax.experimental.pallas import tpu as pltpu


def _round_up(x: int, m: int) -> int:
    return (x + m - 1) // m * m


def mlp_kernel(x_ref, w0_ref, b0_ref, w1_ref, b1_ref, o_ref):
    # x: (TB, D0), w0: (D0, D1p), b0: (1, D1p), w1: (D1p, D2), b1: (1, D2)
    x = x_ref[...]
    h = jnp.dot(x, w0_ref[...], preferred_element_type=jnp.float32) + b0_ref[...]
    # LeakyReLU(negative_slope=0.1)
    h = jnp.where(h > 0, h, 0.1 * h)
    y = jnp.dot(h, w1_ref[...], preferred_element_type=jnp.float32) + b1_ref[...]
    o_ref[...] = y.astype(o_ref.dtype)


def pad_hidden_lane_dense(params):
    """Zero-pad only the HIDDEN feature dim up to a multiple of 128 lanes.

    Done once at parameter-prep time (not per forward call).  The output dim is
    left at its true width (padding it 8x-inflated the HBM writeback).
    Numerics unchanged: padded hidden columns get zero bias -> LeakyReLU(0)=0,
    and the corresponding zero-padded w1 rows contribute nothing.
    """
    w0, b0, w1, b1 = params
    D0, D1 = w0.shape
    D2 = w1.shape[1]
    D1p = _round_up(D1, 128)
    w0p = jnp.zeros((D0, D1p), w0.dtype).at[:, :D1].set(w0)
    b0p = jnp.zeros((1, D1p), b0.dtype).at[:, :D1].set(b0)
    w1p = jnp.zeros((D1p, D2), w1.dtype).at[:D1, :].set(w1)
    b1p = b1.reshape(1, D2)
    return (w0p, b0p, w1p, b1p)


@functools.partial(jax.jit, static_argnames=("block_b",))
def simple_neural_net_forward(x_nchw, padded_params, *, block_b=1024):
    """Forward pass matching SimpleNeuralNetModel.forward.

    x_nchw: (B, 1, H, W) float32  (C must be 1 for the module's reshape)
    padded_params: hidden-lane-padded (w0, b0, w1, b1) from pad_hidden_lane_dense
    block_b: max batch-tile rows (rounded up to a multiple of 8); sweep
             {512, 1024, 2048} for large B -- all fit scoped VMEM on every gen.
    """
    w0, b0, w1, b1 = padded_params
    B = x_nchw.shape[0]
    H, W = x_nchw.shape[2], x_nchw.shape[3]
    # Module does: x = x.reshape(x.shape[0], width * height)   (glue, plain JAX)
    x2d = x_nchw.reshape(B, H * W)

    D0, D1p = w0.shape
    D2 = w1.shape[1]

    if B == 0:  # static shape guard: avoid a zero-length grid
        return jnp.zeros((0, D2), jnp.float32)

    # Batch tile: multiple of 8 sublanes (robust to any block_b), capped at B.
    # Ragged last tile handled by Pallas masking -- no wrapper-side jnp.pad.
    TB = _round_up(min(block_b, B), 8)
    grid = (pl.cdiv(B, TB),)

    flops = 2 * B * D0 * D1p + 2 * B * D1p * D2
    bytes_accessed = 4 * (B * D0 + D0 * D1p + D1p + D1p * D2 + D2 + B * D2)

    out = pl.pallas_call(
        mlp_kernel,
        out_shape=jax.ShapeDtypeStruct((B, D2), jnp.float32),
        grid=grid,
        in_specs=[
            # Activations stream through the batch grid (auto double-buffered).
            pl.BlockSpec((TB, D0), lambda i: (i, 0)),
            # Weights/biases: constant index_map -> DMA'd once, VMEM-resident.
            pl.BlockSpec((D0, D1p), lambda i: (0, 0)),
            pl.BlockSpec((1, D1p), lambda i: (0, 0)),
            pl.BlockSpec((D1p, D2), lambda i: (0, 0)),
            pl.BlockSpec((1, D2), lambda i: (0, 0)),
        ],
        # Output at the TRUE width (16 == full last dim, legal block shape);
        # no padded writeback, no wrapper slice.
        out_specs=pl.BlockSpec((TB, D2), lambda i: (i, 0)),
        compiler_params=pltpu.CompilerParams(
            dimension_semantics=("parallel",),  # shard batch tiles across TCs (v7x)
        ),
        cost_estimate=pl.CostEstimate(
            flops=flops, transcendentals=0, bytes_accessed=bytes_accessed
        ),
    )(x2d, w0, b0, w1, b1)

    return out


def init_params(key, layer_sizes):
    """Deterministic init mimicking nn.Linear (uniform in +/- 1/sqrt(fan_in))."""
    params = []
    keys = jax.random.split(key, 2 * (len(layer_sizes) - 1))
    for i in range(len(layer_sizes) - 1):
        fan_in, fan_out = layer_sizes[i], layer_sizes[i + 1]
        bound = 1.0 / jnp.sqrt(fan_in)
        w = jax.random.uniform(keys[2 * i], (fan_in, fan_out), jnp.float32,
                               minval=-bound, maxval=bound)
        b = jax.random.uniform(keys[2 * i + 1], (1, fan_out), jnp.float32,
                               minval=-bound, maxval=bound)
        params.extend([w, b])
    return tuple(params)


def reference_forward(x_nchw, params):
    """Pure-JAX reference of the same forward for a sanity check."""
    w0, b0, w1, b1 = params
    B = x_nchw.shape[0]
    H, W = x_nchw.shape[2], x_nchw.shape[3]
    x = x_nchw.reshape(B, H * W)
    h = x @ w0 + b0
    h = jnp.where(h > 0, h, 0.1 * h)
    return h @ w1 + b1


if __name__ == "__main__":
    # Module with layer_sizes = [H*W, 32, 16]; input (B, 1, H, W) with H=W=16.
    B, H, W = 2, 16, 16
    layer_sizes = [H * W, 32, 16]

    key = jax.random.PRNGKey(0)
    kx, kp = jax.random.split(key)
    x = jax.random.normal(kx, (B, 1, H, W), dtype=jnp.float32)
    params = init_params(kp, layer_sizes)

    padded_params = pad_hidden_lane_dense(params)

    out = simple_neural_net_forward(x, padded_params)
    out = jax.block_until_ready(out)

    ref = reference_forward(x, params)
    assert out.shape == (B, layer_sizes[-1]), out.shape
    assert jnp.allclose(out, ref, atol=1e-5, rtol=1e-5)

    print("KERNEL_OK")
</pallas_src>

<mosaic_0001>
module attributes {stable_mosaic.version = 11 : i64} {
  func.func @mlp_kernel(%arg0: i32, %arg1: memref<8x256xf32, #tpu.memory_space<vmem>>, %arg2: memref<256x128xf32, #tpu.memory_space<vmem>>, %arg3: memref<1x128xf32, #tpu.memory_space<vmem>>, %arg4: memref<128x16xf32, #tpu.memory_space<vmem>>, %arg5: memref<1x16xf32, #tpu.memory_space<vmem>>, %arg6: memref<8x16xf32, #tpu.memory_space<vmem>>) attributes {dimension_semantics = [#tpu.dimension_semantics<parallel>], iteration_bounds = array<i64: 1>, scalar_prefetch = 0 : i64, scratch_operands = 0 : i64, tpu.core_type = #tpu.core_type<tc>, window_params = [{transform_indices = @transform_0, window_bounds = array<i64: 8, 256>}, {pipeline_mode = #tpu.pipeline_mode<synchronous>, transform_indices = @transform_1, window_bounds = array<i64: 256, 128>}, {pipeline_mode = #tpu.pipeline_mode<synchronous>, transform_indices = @transform_2, window_bounds = array<i64: 1, 128>}, {pipeline_mode = #tpu.pipeline_mode<synchronous>, transform_indices = @transform_3, window_bounds = array<i64: 128, 16>}, {pipeline_mode = #tpu.pipeline_mode<synchronous>, transform_indices = @transform_4, window_bounds = array<i64: 1, 16>}, {transform_indices = @transform_5, window_bounds = array<i64: 8, 16>}]} {
    %c0 = arith.constant 0 : index
    %c0_0 = arith.constant 0 : index
    %0 = vector.load %arg1[%c0, %c0_0] : memref<8x256xf32, #tpu.memory_space<vmem>>, vector<8x256xf32>
    %c0_1 = arith.constant 0 : index
    %c0_2 = arith.constant 0 : index
    %1 = vector.load %arg2[%c0_1, %c0_2] : memref<256x128xf32, #tpu.memory_space<vmem>>, vector<256x128xf32>
    %cst = arith.constant dense<0.000000e+00> : vector<8x128xf32>
    %2 = tpu.matmul %0, %1, %cst {dimension_numbers = #tpu.dot_dimension_numbers<[1], [0], [0], [1], [0, 0, 1, 1], [], []>} : vector<8x256xf32>, vector<256x128xf32>, vector<8x128xf32> -> vector<8x128xf32>
    %c0_3 = arith.constant 0 : index
    %c0_4 = arith.constant 0 : index
    %3 = vector.load %arg3[%c0_3, %c0_4] : memref<1x128xf32, #tpu.memory_space<vmem>>, vector<1x128xf32>
    %4 = vector.broadcast %3 : vector<1x128xf32> to vector<8x128xf32>
    %5 = arith.addf %2, %4 : vector<8x128xf32>
    %cst_5 = arith.constant 0.000000e+00 : f32
    %6 = vector.broadcast %cst_5 : f32 to vector<8x128xf32>
    %7 = arith.cmpf ogt, %5, %6 : vector<8x128xf32>
    %cst_6 = arith.constant 1.000000e-01 : f32
    %8 = vector.broadcast %cst_6 : f32 to vector<8x128xf32>
    %9 = arith.mulf %8, %5 : vector<8x128xf32>
    %10 = arith.select %7, %5, %9 : vector<8x128xi1>, vector<8x128xf32>
    %c0_7 = arith.constant 0 : index
    %c0_8 = arith.constant 0 : index
    %11 = vector.load %arg4[%c0_7, %c0_8] : memref<128x16xf32, #tpu.memory_space<vmem>>, vector<128x16xf32>
    %cst_9 = arith.constant dense<0.000000e+00> : vector<8x16xf32>
    %12 = tpu.matmul %10, %11, %cst_9 {dimension_numbers = #tpu.dot_dimension_numbers<[1], [0], [0], [1], [0, 0, 1, 1], [], []>} : vector<8x128xf32>, vector<128x16xf32>, vector<8x16xf32> -> vector<8x16xf32>
    %c0_10 = arith.constant 0 : index
    %c0_11 = arith.constant 0 : index
    %13 = vector.load %arg5[%c0_10, %c0_11] : memref<1x16xf32, #tpu.memory_space<vmem>>, vector<1x16xf32>
    %14 = vector.broadcast %13 : vector<1x16xf32> to vector<8x16xf32>
    %15 = arith.addf %12, %14 : vector<8x16xf32>
    %c0_12 = arith.constant 0 : index
    %c0_13 = arith.constant 0 : index
    %16 = vector.load %arg6[%c0_12, %c0_13] : memref<8x16xf32, #tpu.memory_space<vmem>>, vector<8x16xf32>
    tpu.vector_store %arg6[%c0_12, %c0_13], %15 {strides = array<i32>} : memref<8x16xf32, #tpu.memory_space<vmem>>, vector<8x16xf32>,
    return
  }
  func.func @transform_0(%arg0: i32) -> (i32, i32) {
    %c0_i32 = arith.constant 0 : i32
    %c0_i32_0 = arith.constant 0 : i32
    return %arg0, %c0_i32 : i32, i32
  }
  func.func @transform_1(%arg0: i32) -> (i32, i32) {
    %c0_i32 = arith.constant 0 : i32
    %c0_i32_0 = arith.constant 0 : i32
    %c0_i32_1 = arith.constant 0 : i32
    return %c0_i32, %c0_i32_0 : i32, i32
  }
  func.func @transform_2(%arg0: i32) -> (i32, i32) {
    %c0_i32 = arith.constant 0 : i32
    %c0_i32_0 = arith.constant 0 : i32
    %c0_i32_1 = arith.constant 0 : i32
    return %c0_i32, %c0_i32_0 : i32, i32
  }
  func.func @transform_3(%arg0: i32) -> (i32, i32) {
    %c0_i32 = arith.constant 0 : i32
    %c0_i32_0 = arith.constant 0 : i32
    %c0_i32_1 = arith.constant 0 : i32
    return %c0_i32, %c0_i32_0 : i32, i32
  }
  func.func @transform_4(%arg0: i32) -> (i32, i32) {
    %c0_i32 = arith.constant 0 : i32
    %c0_i32_0 = arith.constant 0 : i32
    %c0_i32_1 = arith.constant 0 : i32
    return %c0_i32, %c0_i32_0 : i32, i32
  }
  func.func @transform_5(%arg0: i32) -> (i32, i32) {
    %c0_i32 = arith.constant 0 : i32
    %c0_i32_0 = arith.constant 0 : i32
    return %arg0, %c0_i32 : i32, i32
  }
}

</mosaic_0001>

<llo_original>
// kernel: simple_neural_net_forward.1
$region0: #{simple_neural_net_forward.1}
  #allocation0 [shape = 'u32[]', space=smem, size = 0x4, offset = 0x4, fixed_abs, tag = 'smem constant byte address 0x4 - core index']
  #allocation1 [shape = 'u32[144,128]{1,0:T(1,128)}', space=vmem, size = 0x12000, scoped, tag = 'internal scratch']
  %s0 = inlined_call_operand.vmem [shape: f32[2,256], index: 0, kind: input, shape index: {}]
  %s1 = inlined_call_operand.hbm [shape: f32[256,128], index: 1, kind: input, shape index: {}]
  %s2 = inlined_call_operand.vmem [shape: f32[1,128], index: 2, kind: input, shape index: {}]
  %s3 = inlined_call_operand.vmem [shape: f32[128,16], index: 3, kind: input, shape index: {}]
  %s4 = inlined_call_operand.vmem [shape: f32[1,16], index: 4, kind: input, shape index: {}]
  %s5 = inlined_call_operand.hbm [shape: f32[2,16], index: 5, kind: output, shape index: {}]
  %s6 = sld [smem:[#allocation0]]
  $region34: #{simple_neural_net_forward.1} parent=0
    _
  %s8 = ssub.s32 1, %s6
  %s9 = scalar_select 0, %s8, %s6
  $region1: #{simple_neural_net_forward.1} parent=0
    #allocation2 [shape = 'u8[131072]{0}', space=vmem, size = 0x20000, scoped, tag = 'input window, operand 1, single buffered']
    #allocation3 [shape = 's32[1]{0}', space=sflag, size = 0x4, scoped, tag = 'scoped memory for simple_neural_net_forward.1']
    #allocation4 [shape = 's32[1]{0}', space=sflag, size = 0x4, scoped, tag = 'scoped memory for simple_neural_net_forward.1']
    #allocation5 [shape = 'u8[4096]{0}', space=vmem, size = 0x1000, scoped, tag = 'output window, operand 0, single buffered']
    %10 = vsyncpa [#allocation3], 0
    %11 = vsyncpa [#allocation4], 0
    // Predicated region
    $region2: #{simple_neural_net_forward.1} parent=1 // pred_check
      _
    $region3: #{simple_neural_net_forward.1} parent=1 // pred_check_branch
      %13 = sbr.rel (0) target = $region5
    $region4: #{simple_neural_net_forward.1} parent=1 // pred_region
      _
    $region5: #{simple_neural_net_forward.1} parent=1 // pred_fallthru
      _
    // Predicated region
    $region6: #{simple_neural_net_forward.1} parent=1 // pred_check
      _
    $region7: #{simple_neural_net_forward.1} parent=1 // pred_check_branch
      %15 = sbr.rel (0) target = $region9
    $region8: #{simple_neural_net_forward.1} parent=1 // pred_region
      %s17 = ssub.s32 4096, 4096
      %18 = vsyncadd [#allocation3], %s17
      %s19 = sshll.u32 [#allocation2], 4
      %s20 = int_to_ptr.vmem [resolvable:$true] %s19
      %25 = dma.hbm_to_vmem [thread:$0]  %s1, 4096, %s20, [#allocation3], 128, 128, 8
    $region9: #{simple_neural_net_forward.1} parent=1 // pred_fallthru
      _
    // Predicated region
    $region10: #{simple_neural_net_forward.1} parent=1 // pred_check
      _
    $region11: #{simple_neural_net_forward.1} parent=1 // pred_check_branch
      %27 = sbr.rel (0) target = $region13
    $region12: #{simple_neural_net_forward.1} parent=1 // pred_region
      _
    $region13: #{simple_neural_net_forward.1} parent=1 // pred_fallthru
      _
    // Predicated region
    $region14: #{simple_neural_net_forward.1} parent=1 // pred_check
      _
    $region15: #{simple_neural_net_forward.1} parent=1 // pred_check_branch
      %29 = sbr.rel (0) target = $region17
    $region16: #{simple_neural_net_forward.1} parent=1 // pred_region
      _
    $region17: #{simple_neural_net_forward.1} parent=1 // pred_fallthru
      _
    // Predicated region
    $region18: #{simple_neural_net_forward.1} parent=1 // pred_check
      _
    $region19: #{simple_neural_net_forward.1} parent=1 // pred_check_branch
      %31 = sbr.rel (0) target = $region21
    $region20: #{simple_neural_net_forward.1} parent=1 // pred_region
      _
    $region21: #{simple_neural_net_forward.1} parent=1 // pred_fallthru
      _
    // Predicated region
    $region22: #{simple_neural_net_forward.1} parent=1 // pred_check
      _
    $region23: #{simple_neural_net_forward.1} parent=1 // pred_check_branch
      %33 = sbr.rel (0) target = $region25
    $region24: #{simple_neural_net_forward.1} parent=1 // pred_region
      %34 = dma.done [#allocation3], 4096
    $region25: #{simple_neural_net_forward.1} parent=1 // pred_fallthru
      _
    %v35 = vld [vmem:[%s0] sm:$0xf]
    %v36 = vld [vmem:[%s0 + $0x4] sm:$0xf]
    %v37 = vld [vmem:[%s0 + $0x8] sm:$0xf]
    %v38 = vld [vmem:[%s0 + $0xc] sm:$0xf]
    %v39 = vld [vmem:[#allocation2] sm:$0xff]
    %v40 = vld [vmem:[#allocation2 + $0x8] sm:$0xff]
    %v41 = vld [vmem:[#allocation2 + $0x10] sm:$0xff]
    %v42 = vld [vmem:[#allocation2 + $0x18] sm:$0xff]
    %v43 = vld [vmem:[#allocation2 + $0x20] sm:$0xff]
    %v44 = vld [vmem:[#allocation2 + $0x28] sm:$0xff]
    %v45 = vld [vmem:[#allocation2 + $0x30] sm:$0xff]
    %v46 = vld [vmem:[#allocation2 + $0x38] sm:$0xff]
    %v47 = vld [vmem:[#allocation2 + $0x40] sm:$0xff]
    %v48 = vld [vmem:[#allocation2 + $0x48] sm:$0xff]
    %v49 = vld [vmem:[#allocation2 + $0x50] sm:$0xff]
    %v50 = vld [vmem:[#allocation2 + $0x58] sm:$0xff]
    %v51 = vld [vmem:[#allocation2 + $0x60] sm:$0xff]
    %v52 = vld [vmem:[#allocation2 + $0x68] sm:$0xff]
    %v53 = vld [vmem:[#allocation2 + $0x70] sm:$0xff]
    %v54 = vld [vmem:[#allocation2 + $0x78] sm:$0xff]
    %v55 = vld [vmem:[#allocation2 + $0x80] sm:$0xff]
    %v56 = vld [vmem:[#allocation2 + $0x88] sm:$0xff]
    %v57 = vld [vmem:[#allocation2 + $0x90] sm:$0xff]
    %v58 = vld [vmem:[#allocation2 + $0x98] sm:$0xff]
    %v59 = vld [vmem:[#allocation2 + $0xa0] sm:$0xff]
    %v60 = vld [vmem:[#allocation2 + $0xa8] sm:$0xff]
    %v61 = vld [vmem:[#allocation2 + $0xb0] sm:$0xff]
    %v62 = vld [vmem:[#allocation2 + $0xb8] sm:$0xff]
    %v63 = vld [vmem:[#allocation2 + $0xc0] sm:$0xff]
    %v64 = vld [vmem:[#allocation2 + $0xc8] sm:$0xff]
    %v65 = vld [vmem:[#allocation2 + $0xd0] sm:$0xff]
    %v66 = vld [vmem:[#allocation2 + $0xd8] sm:$0xff]
    %v67 = vld [vmem:[#allocation2 + $0xe0] sm:$0xff]
    %v68 = vld [vmem:[#allocation2 + $0xe8] sm:$0xff]
    %v69 = vld [vmem:[#allocation2 + $0xf0] sm:$0xff]
    %v70 = vld [vmem:[#allocation2 + $0xf8] sm:$0xff]
    %v71 = vld [vmem:[%s2] sm:$0x1]
    %v73 = vlaneseq
    %v74 = vshrl.u32 %v73, 7
    %v75 = vsub.s32 0, %v74
    %v76 = vrot.slane %v71, %v75
    %v82 = vcombine.low %v35, %v36
    %v83 = vcombine.low %v37, %v38
    %v85 = vunpack.c.l.s4 1983009808
    %v86 = vunpack.c.0.s8 %v85
    %v87 = vlaneseq
    %v88 = vshrl.u32 %v87, 7
    %v89 = vsub.s32 %v86, %v88
    %v90 = vrot.slane %v82, %v89
    %v92 = vunpack.c.l.s4 1983009808
    %v93 = vunpack.c.0.s8 %v92
    %v94 = vlaneseq
    %v95 = vshrl.u32 %v94, 7
    %v96 = vsub.s32 %v93, %v95
    %v97 = vrot.slane %v83, %v96
    %v98 = vcombine.low %v90, %v97
    %v99 = vcombine.high %v90, %v97
    %102 = vmatprep.subr.mxu0 0.0
    %103 = vmatpush1.msra.mxu0 %v39
    %104 = vmatprep.subr.mxu0 0.0
    %105 = vmatpush1.msra.mxu0 %v40
    %106 = vmatprep.subr.mxu0 0.0
    %107 = vmatpush1.msra.mxu0 %v41
    %108 = vmatprep.subr.mxu0 0.0
    %109 = vmatpush1.msra.mxu0 %v42
    %110 = vmatprep.subr.mxu0 0.0
    %111 = vmatpush1.msra.mxu0 %v43
    %112 = vmatprep.subr.mxu0 0.0
    %113 = vmatpush1.msra.mxu0 %v44
    %114 = vmatprep.subr.mxu0 0.0
    %115 = vmatpush1.msra.mxu0 %v45
    %116 = vmatprep.subr.mxu0 0.0
    %117 = vmatpush1.msra.mxu0 %v46
    %118 = vmatprep.subr.mxu0 0.0
    %119 = vmatpush1.msra.mxu0 %v47
    %120 = vmatprep.subr.mxu0 0.0
    %121 = vmatpush1.msra.mxu0 %v48
    %122 = vmatprep.subr.mxu0 0.0
    %123 = vmatpush1.msra.mxu0 %v49
    %124 = vmatprep.subr.mxu0 0.0
    %125 = vmatpush1.msra.mxu0 %v50
    %126 = vmatprep.subr.mxu0 0.0
    %127 = vmatpush1.msra.mxu0 %v51
    %128 = vmatprep.subr.mxu0 0.0
    %129 = vmatpush1.msra.mxu0 %v52
    %130 = vmatprep.subr.mxu0 0.0
    %131 = vmatpush1.msra.mxu0 %v53
    %132 = vmatprep.subr.mxu0 0.0
    %133 = vmatpush1.msra.mxu0 %v54
    %134 = vmatprep.subr.mxu0 0.0
    %135 = vmatpush1.msra.mxu0 %v55
    %136 = vmatprep.subr.mxu0 0.0
    %137 = vmatpush1.msra.mxu0 %v56
    %138 = vmatprep.subr.mxu0 0.0
    %139 = vmatpush1.msra.mxu0 %v57
    %140 = vmatprep.subr.mxu0 0.0
    %141 = vmatpush1.msra.mxu0 %v58
    %142 = vmatprep.subr.mxu0 0.0
    %143 = vmatpush1.msra.mxu0 %v59
    %144 = vmatprep.subr.mxu0 0.0
    %145 = vmatpush1.msra.mxu0 %v60
    %146 = vmatprep.subr.mxu0 0.0
    %147 = vmatpush1.msra.mxu0 %v61
    %148 = vmatprep.subr.mxu0 0.0
    %149 = vmatpush1.msra.mxu0 %v62
    %150 = vmatprep.subr.mxu0 0.0
    %151 = vmatpush1.msra.mxu0 %v63
    %152 = vmatprep.subr.mxu0 0.0
    %153 = vmatpush1.msra.mxu0 %v64
    %154 = vmatprep.subr.mxu0 0.0
    %155 = vmatpush1.msra.mxu0 %v65
    %156 = vmatprep.subr.mxu0 0.0
    %157 = vmatpush1.msra.mxu0 %v66
    %158 = vmatprep.subr.mxu0 0.0
    %159 = vmatpush1.msra.mxu0 %v67
    %160 = vmatprep.subr.mxu0 0.0
    %161 = vmatpush1.msra.mxu0 %v68
    %162 = vmatprep.subr.mxu0 0.0
    %163 = vmatpush1.msra.mxu0 %v69
    %164 = vmatprep.subr.mxu0 0.0
    %165 = vmatpush1.msra.mxu0 %v70
    %166 = vmatprep.mubr.f32.mxu0 %v99
    %167 = vmatmul.mubr.f32.gmra.mrb[0].mxu0 %v98
    %v168 = vpop.f32.mrb[0].mxu0
    %v169 = vadd.f32 %v76, %v168
    %v170 = vpop.f32.mrb[0].mxu0
    %171 = vdwg.mxu0
    %vm172 = vcmp.gt.f32.partialorder %v169, 0.0
    %v173 = vmul.f32 %v169, 0.1
    %v174 = vsel %vm172, %v169, %v173
    %v175 = vld [vmem:[%s3] sm:$0xff]
    %v176 = vld [vmem:[%s3 + $0x8] sm:$0xff]
    %v177 = vld [vmem:[%s3 + $0x10] sm:$0xff]
    %v178 = vld [vmem:[%s3 + $0x18] sm:$0xff]
    %v179 = vld [vmem:[%s3 + $0x20] sm:$0xff]
    %v180 = vld [vmem:[%s3 + $0x28] sm:$0xff]
    %v181 = vld [vmem:[%s3 + $0x30] sm:$0xff]
    %v182 = vld [vmem:[%s3 + $0x38] sm:$0xff]
    %v183 = vld [vmem:[%s3 + $0x40] sm:$0xff]
    %v184 = vld [vmem:[%s3 + $0x48] sm:$0xff]
    %v185 = vld [vmem:[%s3 + $0x50] sm:$0xff]
    %v186 = vld [vmem:[%s3 + $0x58] sm:$0xff]
    %v187 = vld [vmem:[%s3 + $0x60] sm:$0xff]
    %v188 = vld [vmem:[%s3 + $0x68] sm:$0xff]
    %v189 = vld [vmem:[%s3 + $0x70] sm:$0xff]
    %v190 = vld [vmem:[%s3 + $0x78] sm:$0xff]
    %v191 = vld [vmem:[%s4] sm:$0x1]
    %v193 = vlaneseq
    %v194 = vshrl.u32 %v193, 7
    %v195 = vsub.s32 0, %v194
    %v196 = vrot.slane %v191, %v195
    %198 = vmatprep.subr.mxu0 0.0
    %199 = vmatpush1.msra.mxu0 %v175
    %200 = vmatprep.subr.mxu0 0.0
    %201 = vmatpush1.msra.mxu0 %v176
    %202 = vmatprep.subr.mxu0 0.0
    %203 = vmatpush1.msra.mxu0 %v177
    %204 = vmatprep.subr.mxu0 0.0
    %205 = vmatpush1.msra.mxu0 %v178
    %206 = vmatprep.subr.mxu0 0.0
    %207 = vmatpush1.msra.mxu0 %v179
    %208 = vmatprep.subr.mxu0 0.0
    %209 = vmatpush1.msra.mxu0 %v180
    %210 = vmatprep.subr.mxu0 0.0
    %211 = vmatpush1.msra.mxu0 %v181
    %212 = vmatprep.subr.mxu0 0.0
    %213 = vmatpush1.msra.mxu0 %v182
    %214 = vmatprep.subr.mxu0 0.0
    %215 = vmatpush1.msra.mxu0 %v183
    %216 = vmatprep.subr.mxu0 0.0
    %217 = vmatpush1.msra.mxu0 %v184
    %218 = vmatprep.subr.mxu0 0.0
    %219 = vmatpush1.msra.mxu0 %v185
    %220 = vmatprep.subr.mxu0 0.0
    %221 = vmatpush1.msra.mxu0 %v186
    %222 = vmatprep.subr.mxu0 0.0
    %223 = vmatpush1.msra.mxu0 %v187
    %224 = vmatprep.subr.mxu0 0.0
    %225 = vmatpush1.msra.mxu0 %v188
    %226 = vmatprep.subr.mxu0 0.0
    %227 = vmatpush1.msra.mxu0 %v189
    %228 = vmatprep.subr.mxu0 0.0
    %229 = vmatpush1.msra.mxu0 %v190
    %230 = vmatprep.subr.mxu0 0.0
    %231 = vmatpush1.msra.mxu0 0.0
    %232 = vmatprep.subr.mxu0 0.0
    %233 = vmatpush1.msra.mxu0 0.0
    %234 = vmatprep.subr.mxu0 0.0
    %235 = vmatpush1.msra.mxu0 0.0
    %236 = vmatprep.subr.mxu0 0.0
    %237 = vmatpush1.msra.mxu0 0.0
    %238 = vmatprep.subr.mxu0 0.0
    %239 = vmatpush1.msra.mxu0 0.0
    %240 = vmatprep.subr.mxu0 0.0
    %241 = vmatpush1.msra.mxu0 0.0
    %242 = vmatprep.subr.mxu0 0.0
    %243 = vmatpush1.msra.mxu0 0.0
    %244 = vmatprep.subr.mxu0 0.0
    %245 = vmatpush1.msra.mxu0 0.0
    %246 = vmatprep.subr.mxu0 0.0
    %247 = vmatpush1.msra.mxu0 0.0
    %248 = vmatprep.subr.mxu0 0.0
    %249 = vmatpush1.msra.mxu0 0.0
    %250 = vmatprep.subr.mxu0 0.0
    %251 = vmatpush1.msra.mxu0 0.0
    %252 = vmatprep.subr.mxu0 0.0
    %253 = vmatpush1.msra.mxu0 0.0
    %254 = vmatprep.subr.mxu0 0.0
    %255 = vmatpush1.msra.mxu0 0.0
    %256 = vmatprep.subr.mxu0 0.0
    %257 = vmatpush1.msra.mxu0 0.0
    %258 = vmatprep.subr.mxu0 0.0
    %259 = vmatpush1.msra.mxu0 0.0
    %260 = vmatprep.subr.mxu0 0.0
    %261 = vmatpush1.msra.mxu0 0.0
    %262 = vmatprep.mubr.f32.mxu0 0.0
    %263 = vmatmul.mubr.f32.gmra.mrb[0].mxu0 %v174
    %v264 = vpop.f32.mrb[0].mxu0
    %v265 = vadd.f32 %v196, %v264
    %v266 = vpop.f32.mrb[0].mxu0
    %267 = vdwg.mxu0
    %vm268 = vcmask 130048
    %269 = vst.msk [vmem:[#allocation5] sm:$0xff] %vm268, %v265
    // Predicated region
    $region26: #{simple_neural_net_forward.1} parent=1 // pred_check
      _
    $region27: #{simple_neural_net_forward.1} parent=1 // pred_check_branch
      %271 = sbr.rel (0) target = $region29
    $region28: #{simple_neural_net_forward.1} parent=1 // pred_region
      %s273 = ssub.s32 128, 32
      %274 = vsyncadd [#allocation4], %s273
      %s275 = sshll.u32 [#allocation5], 4
      %s276 = int_to_ptr.vmem [resolvable:$true] %s275
      %281 = dma.vmem_to_hbm [thread:$0]  %s276, 32, %s5, [#allocation4], 32, 32, 2
    $region29: #{simple_neural_net_forward.1} parent=1 // pred_fallthru
      _
    // Predicated region
    $region30: #{simple_neural_net_forward.1} parent=1 // pred_check
      _
    $region31: #{simple_neural_net_forward.1} parent=1 // pred_check_branch
      %283 = sbr.rel (0) target = $region33
    $region32: #{simple_neural_net_forward.1} parent=1 // pred_region
      %284 = dma.done [#allocation4], 128
    $region33: #{simple_neural_net_forward.1} parent=1 // pred_fallthru
      _
    %285 = vsyncpa [#allocation3], 1
    %286 = vsyncpa [#allocation4], 1

</llo_original>
